<compile_context>
chip_gen: v7x
topology: tpu7x:2x2x1
jax: 0.10.0
libtpu: 0.0.40
codegen_flags: <defaults>
</compile_context>

<pallas_src>
import functools

import jax
import jax.numpy as jnp
from jax.experimental import pallas as pl
from jax.experimental.pallas import tpu as pltpu


def _round_up(x, m):
    return (x + m - 1) // m * m


def _conv_im2col_kernel(x_ref, w_ref, o_ref, *, C, K, W, L, D):
    """Fused on-chip im2col + single MXU contraction.

    x_ref: (C, L_in)  channel-major, spatially-flattened input (zero-padded lanes)
    w_ref: (8, D)     packed weight tile: rows [0:C_out] = [w_mat | bias | 0]
    o_ref: (8, L)     lane-dense "wide" conv output (valid prefix; wrapper crops)
    """
    x = x_ref[...]                                   # single load of the input tile

    # K coarse lane shifts of kh*W (reused across kw), stacked along sublanes.
    coarse = jnp.concatenate(
        [x[:, kh * W: kh * W + L + (K - 1)] for kh in range(K)],
        axis=0)                                      # (K*C, L+K-1), rows [kh][c]

    # K fine lane shifts of kw over the whole stacked tile.
    col = jnp.concatenate(
        [coarse[:, kw: kw + L] for kw in range(K)],
        axis=0)                                      # (K*K*C, L), rows [kw][kh][c]

    # Bias folded into the contraction via a ones row; zero-pad depth to D=128
    # (a full-depth MXU pass on v5e; free on the 256-deep v6e/v7x MXU).
    col = jnp.concatenate(
        [col,
         jnp.ones((1, L), x.dtype),
         jnp.zeros((D - K * K * C - 1, L), x.dtype)],
        axis=0)                                      # (D, L)

    # One (8, D) @ (D, L) dot, f32 accumulation.
    o_ref[...] = jnp.dot(w_ref[...], col,
                         preferred_element_type=jnp.float32).astype(o_ref.dtype)


@jax.jit
def conv2d_pallas(x, weight, bias):
    """Conv2d, stride=1, no padding, NCHW in / NCHW out (PyTorch semantics)."""
    N, C, H, W = x.shape
    C_out, C_in, K, K2 = weight.shape
    assert C == C_in and K == K2
    assert C_out <= 8 and C * K * K + 1 <= 128
    OH, OW = H - K + 1, W - K + 1

    S = N * H * W                                 # flattened batch*spatial size
    s_max = (K - 1) * W + (K - 1)                 # largest in-kernel lane shift
    L = _round_up(S, 128)                         # lane-dense output width
    L_in = _round_up(L + s_max, 128)              # padded input width
    D = 128                                       # padded contraction depth

    # Cheap layout glue (fused into this jit; no HBM im2col blow-up).
    x_flat = jnp.transpose(x, (1, 0, 2, 3)).reshape(C, S)       # (C, N*H*W)
    x_pad = jnp.pad(x_flat, ((0, 0), (0, L_in - S)))            # (C, L_in)

    # Single packed weight tile; row order [kw][kh][c] matches the in-kernel col.
    w_mat = jnp.transpose(weight, (0, 3, 2, 1)).reshape(C_out, K * K * C)
    w_pack = jnp.zeros((8, D), jnp.float32)
    w_pack = w_pack.at[:C_out, :K * K * C].set(w_mat.astype(jnp.float32))
    w_pack = w_pack.at[:C_out, K * K * C].set(bias.astype(jnp.float32))

    kernel = functools.partial(_conv_im2col_kernel, C=C, K=K, W=W, L=L, D=D)

    out_wide = pl.pallas_call(
        kernel,
        out_shape=jax.ShapeDtypeStruct((8, L), x.dtype),
        in_specs=[
            pl.BlockSpec(memory_space=pltpu.MemorySpace.VMEM),
            pl.BlockSpec(memory_space=pltpu.MemorySpace.VMEM),
        ],
        out_specs=pl.BlockSpec(memory_space=pltpu.MemorySpace.VMEM),
    )(x_pad, w_pack)

    # Crop padded rows/lanes, un-flatten to (C_out, N, H, W), keep the valid
    # conv window, back to NCHW.
    out = out_wide[:C_out, :S].reshape(C_out, N, H, W)[:, :, :OH, :OW]
    return jnp.transpose(out, (1, 0, 2, 3))


class NetPallas:
    """Pallas version of `Net` (only ops reachable from forward())."""

    def __init__(self, key):
        k_w, k_b = jax.random.split(key)
        fan_in = 3 * 5 * 5
        bound = 1.0 / (fan_in ** 0.5)
        # Deterministic init mimicking PyTorch Conv2d default (uniform +/- 1/sqrt(fan_in)).
        self.conv1_w = jax.random.uniform(
            k_w, (6, 3, 5, 5), jnp.float32, minval=-bound, maxval=bound)
        self.conv1_b = jax.random.uniform(
            k_b, (6,), jnp.float32, minval=-bound, maxval=bound)
        # TODO(synk): `self.head` is an externally supplied backbone `n` (not defined
        #   in this file) whose forward semantics are unknown; treated as identity.
        #   pool / conv2 / fc1 / fc2 / fc3 are constructed in __init__ but never used
        #   in forward(), so they are not implemented.

    def __call__(self, x):
        x = x  # head(x) -> identity (see TODO above)
        return conv2d_pallas(x, self.conv1_w, self.conv1_b)


if __name__ == "__main__":
    key = jax.random.PRNGKey(0)
    k_params, k_x = jax.random.split(key)

    net = NetPallas(k_params)

    # Small NCHW input consistent with conv1 (3 input channels).
    x = jax.random.normal(k_x, (2, 3, 16, 16), dtype=jnp.float32)

    out = net(x)
    out = jax.block_until_ready(out)
    assert out.shape == (2, 6, 12, 12), out.shape

    # Cross-check against XLA's conv (PyTorch NCHW / OIHW semantics).
    ref = jax.lax.conv_general_dilated(
        x, net.conv1_w, window_strides=(1, 1), padding="VALID",
        dimension_numbers=("NCHW", "OIHW", "NCHW"),
    ) + net.conv1_b.reshape(1, 6, 1, 1)
    assert jnp.allclose(out, ref, atol=1e-4, rtol=1e-4)

    print("KERNEL_OK")
</pallas_src>

<mosaic_0001>
module attributes {stable_mosaic.version = 11 : i64} {
  func.func @_conv_im2col_kernel(%arg0: memref<3x640xf32, #tpu.memory_space<vmem>>, %arg1: memref<8x128xf32, #tpu.memory_space<vmem>>, %arg2: memref<8x512xf32, #tpu.memory_space<vmem>>) attributes {dimension_semantics = [], scalar_prefetch = 0 : i64, scratch_operands = 0 : i64, tpu.core_type = #tpu.core_type<tc>} {
    %c0 = arith.constant 0 : index
    %c0_0 = arith.constant 0 : index
    %0 = vector.load %arg0[%c0, %c0_0] : memref<3x640xf32, #tpu.memory_space<vmem>>, vector<3x640xf32>
    %1 = vector.extract_strided_slice %0 {offsets = [0, 0], sizes = [3, 516], strides = [1, 1]} : vector<3x640xf32> to vector<3x516xf32>
    %2 = vector.extract_strided_slice %0 {offsets = [0, 16], sizes = [3, 516], strides = [1, 1]} : vector<3x640xf32> to vector<3x516xf32>
    %3 = vector.extract_strided_slice %0 {offsets = [0, 32], sizes = [3, 516], strides = [1, 1]} : vector<3x640xf32> to vector<3x516xf32>
    %4 = vector.extract_strided_slice %0 {offsets = [0, 48], sizes = [3, 516], strides = [1, 1]} : vector<3x640xf32> to vector<3x516xf32>
    %5 = vector.extract_strided_slice %0 {offsets = [0, 64], sizes = [3, 516], strides = [1, 1]} : vector<3x640xf32> to vector<3x516xf32>
    %6 = tpu.concatenate %1, %2, %3, %4, %5 in 0 : vector<3x516xf32>, vector<3x516xf32>, vector<3x516xf32>, vector<3x516xf32>, vector<3x516xf32> -> vector<15x516xf32>
    %7 = vector.extract_strided_slice %6 {offsets = [0, 0], sizes = [15, 512], strides = [1, 1]} : vector<15x516xf32> to vector<15x512xf32>
    %8 = vector.extract_strided_slice %6 {offsets = [0, 1], sizes = [15, 512], strides = [1, 1]} : vector<15x516xf32> to vector<15x512xf32>
    %9 = vector.extract_strided_slice %6 {offsets = [0, 2], sizes = [15, 512], strides = [1, 1]} : vector<15x516xf32> to vector<15x512xf32>
    %10 = vector.extract_strided_slice %6 {offsets = [0, 3], sizes = [15, 512], strides = [1, 1]} : vector<15x516xf32> to vector<15x512xf32>
    %11 = vector.extract_strided_slice %6 {offsets = [0, 4], sizes = [15, 512], strides = [1, 1]} : vector<15x516xf32> to vector<15x512xf32>
    %12 = tpu.concatenate %7, %8, %9, %10, %11 in 0 : vector<15x512xf32>, vector<15x512xf32>, vector<15x512xf32>, vector<15x512xf32>, vector<15x512xf32> -> vector<75x512xf32>
    %cst = arith.constant 1.000000e+00 : f32
    %13 = vector.broadcast %cst : f32 to vector<1x512xf32>
    %cst_1 = arith.constant 0.000000e+00 : f32
    %14 = vector.broadcast %cst_1 : f32 to vector<52x512xf32>
    %15 = tpu.concatenate %12, %13, %14 in 0 : vector<75x512xf32>, vector<1x512xf32>, vector<52x512xf32> -> vector<128x512xf32>
    %c0_2 = arith.constant 0 : index
    %c0_3 = arith.constant 0 : index
    %16 = vector.load %arg1[%c0_2, %c0_3] : memref<8x128xf32, #tpu.memory_space<vmem>>, vector<8x128xf32>
    %cst_4 = arith.constant dense<0.000000e+00> : vector<8x512xf32>
    %17 = tpu.matmul %16, %15, %cst_4 {dimension_numbers = #tpu.dot_dimension_numbers<[1], [0], [0], [1], [0, 0, 1, 1], [], []>} : vector<8x128xf32>, vector<128x512xf32>, vector<8x512xf32> -> vector<8x512xf32>
    %c0_5 = arith.constant 0 : index
    %c0_6 = arith.constant 0 : index
    %18 = vector.load %arg2[%c0_5, %c0_6] : memref<8x512xf32, #tpu.memory_space<vmem>>, vector<8x512xf32>
    tpu.vector_store %arg2[%c0_5, %c0_6], %17 {strides = array<i32>} : memref<8x512xf32, #tpu.memory_space<vmem>>, vector<8x512xf32>,
    return
  }
}

</mosaic_0001>

<llo_original>
// kernel: conv2d_pallas.1
$region0: #{conv2d_pallas.1}
  #allocation0 [shape = 'u32[]', space=smem, size = 0x4, offset = 0x4, fixed_abs, tag = 'smem constant byte address 0x4 - core index']
  #allocation1 [shape = 'u32[144,128]{1,0:T(1,128)}', space=vmem, size = 0x12000, scoped, tag = 'internal scratch']
  %s0 = inlined_call_operand.vmem [shape: f32[3,640], index: 0, kind: input, shape index: {}]
  %s1 = inlined_call_operand.vmem [shape: f32[8,128], index: 1, kind: input, shape index: {}]
  %s2 = inlined_call_operand.vmem [shape: f32[8,512], index: 2, kind: output, shape index: {}]
  %s3 = sld [smem:[#allocation0]]
  $region18: #{conv2d_pallas.1} parent=0
    _
  %s5 = ssub.s32 1, %s3
  %s6 = scalar_select 0, %s5, %s3
  // Predicated region
  $region2: #{conv2d_pallas.1} parent=0 // pred_check
    _
  $region3: #{conv2d_pallas.1} parent=0 // pred_check_branch
    %8 = sbr.rel (0) target = $region5
  $region4: #{conv2d_pallas.1} parent=0 // pred_region
    _
  $region5: #{conv2d_pallas.1} parent=0 // pred_fallthru
    _
  // Predicated region
  $region6: #{conv2d_pallas.1} parent=0 // pred_check
    _
  $region7: #{conv2d_pallas.1} parent=0 // pred_check_branch
    %10 = sbr.rel (0) target = $region9
  $region8: #{conv2d_pallas.1} parent=0 // pred_region
    _
  $region9: #{conv2d_pallas.1} parent=0 // pred_fallthru
    _
  %v11 = vld [vmem:[%s0] sm:$0x77]
  %v12 = vld [vmem:[%s0 + $0x8] sm:$0x77]
  %v13 = vld [vmem:[%s0 + $0x10] sm:$0x7]
  %v17 = vcombine.high %v11, %v11
  %v18 = vcombine.high %v12, %v12
  %v21 = vrot.slane %v11, 5
  %v22 = vrot.slane %v17, 5
  %v23 = vrot.slane %v12, 5
  %v24 = vrot.slane %v18, 5
  %v25 = vrot.slane %v13, 5
  %26 = vrot.lane.b32.xlu0 %v21, 112
  %v27 = vpop.permute.xlu0 %26
  %28 = vrot.lane.b32.xlu0 %v22, 112
  %v29 = vpop.permute.xlu0 %28
  %30 = vrot.lane.b32.xlu0 %v23, 112
  %v31 = vpop.permute.xlu0 %30
  %32 = vrot.lane.b32.xlu0 %v24, 112
  %v33 = vpop.permute.xlu0 %32
  %34 = vrot.lane.b32.xlu0 %v25, 112
  %v35 = vpop.permute.xlu0 %34
  %vm36 = vcmask 916480
  %v37 = vsel %vm36, %v27, %v29
  %v38 = vsel %vm36, %v29, %v31
  %v39 = vsel %vm36, %v31, %v33
  %v40 = vsel %vm36, %v33, %v35
  %v46 = vrot.slane %v11, 2
  %v47 = vrot.slane %v17, 2
  %v48 = vrot.slane %v12, 2
  %v49 = vrot.slane %v18, 2
  %v50 = vrot.slane %v13, 2
  %51 = vrot.lane.b32.xlu0 %v46, 96
  %v52 = vpop.permute.xlu0 %51
  %53 = vrot.lane.b32.xlu0 %v47, 96
  %v54 = vpop.permute.xlu0 %53
  %55 = vrot.lane.b32.xlu0 %v48, 96
  %v56 = vpop.permute.xlu0 %55
  %57 = vrot.lane.b32.xlu0 %v49, 96
  %v58 = vpop.permute.xlu0 %57
  %59 = vrot.lane.b32.xlu0 %v50, 96
  %v60 = vpop.permute.xlu0 %59
  %vm61 = vcmask 785408
  %v62 = vsel %vm61, %v52, %v54
  %v63 = vsel %vm61, %v54, %v56
  %v64 = vsel %vm61, %v56, %v58
  %v65 = vsel %vm61, %v58, %v60
  %v71 = vrot.slane %v11, 7
  %v72 = vrot.slane %v17, 7
  %v73 = vrot.slane %v12, 7
  %v74 = vrot.slane %v18, 7
  %v75 = vrot.slane %v13, 7
  %76 = vrot.lane.b32.xlu0 %v71, 80
  %v77 = vpop.permute.xlu0 %76
  %78 = vrot.lane.b32.xlu0 %v72, 80
  %v79 = vpop.permute.xlu0 %78
  %80 = vrot.lane.b32.xlu0 %v73, 80
  %v81 = vpop.permute.xlu0 %80
  %82 = vrot.lane.b32.xlu0 %v74, 80
  %v83 = vpop.permute.xlu0 %82
  %84 = vrot.lane.b32.xlu0 %v75, 80
  %v85 = vpop.permute.xlu0 %84
  %vm86 = vcmask 654336
  %v87 = vsel %vm86, %v77, %v79
  %v88 = vsel %vm86, %v79, %v81
  %v89 = vsel %vm86, %v81, %v83
  %v90 = vsel %vm86, %v83, %v85
  %v96 = vcombine.low %v11, %v11
  %v97 = vcombine.low %v12, %v12
  %v98 = vcombine.low %v13, %v13
  %99 = vrot.lane.b32.xlu0 %v96, 64
  %v100 = vpop.permute.xlu0 %99
  %101 = vrot.lane.b32.xlu0 %v11, 64
  %v102 = vpop.permute.xlu0 %101
  %103 = vrot.lane.b32.xlu0 %v97, 64
  %v104 = vpop.permute.xlu0 %103
  %105 = vrot.lane.b32.xlu0 %v12, 64
  %v106 = vpop.permute.xlu0 %105
  %107 = vrot.lane.b32.xlu0 %v98, 64
  %v108 = vpop.permute.xlu0 %107
  %vm109 = vcmask 523264
  %v110 = vsel %vm109, %v100, %v102
  %v111 = vsel %vm109, %v102, %v104
  %v112 = vsel %vm109, %v104, %v106
  %v113 = vsel %vm109, %v106, %v108
  %vm119 = vcmask 1042432
  %v120 = vsel %vm119, %v11, %v37
  %v121 = vsel %vm119, %v17, %v38
  %v122 = vsel %vm119, %v12, %v39
  %v123 = vsel %vm119, %v18, %v40
  %v124 = vsel %vm119, %v13, %v35
  %vm125 = vcmask 1045504
  %v126 = vsel %vm125, %v120, %v62
  %v127 = vsel %vm125, %v121, %v63
  %v128 = vsel %vm125, %v122, %v64
  %v129 = vsel %vm125, %v123, %v65
  %v130 = vsel %vm125, %v124, %v60
  %vm131 = vcmask 1040384
  %v132 = vsel %vm131, %v62, %v87
  %v133 = vsel %vm131, %v63, %v88
  %v134 = vsel %vm131, %v64, %v89
  %v135 = vsel %vm131, %v65, %v90
  %v136 = vsel %vm131, %v60, %v85
  %vm137 = vcmask 1043456
  %v138 = vsel %vm137, %v132, %v110
  %v139 = vsel %vm137, %v133, %v111
  %v140 = vsel %vm137, %v134, %v112
  %v141 = vsel %vm137, %v135, %v113
  %v142 = vsel %vm137, %v136, %v108
  %vm153 = vcmask 1046528
  %v154 = vrot.slane %v126, 1
  %v155 = vrot.slane %v127, 1
  %v156 = vrot.slane %v128, 1
  %v157 = vrot.slane %v129, 1
  %v158 = vrot.slane %v130, 1
  %v159 = vrot.slane %v138, 1
  %v160 = vsel %vm153, %v154, %v159
  %v161 = vrot.slane %v139, 1
  %v162 = vsel %vm153, %v155, %v161
  %v163 = vrot.slane %v140, 1
  %v164 = vsel %vm153, %v156, %v163
  %v165 = vrot.slane %v141, 1
  %v166 = vsel %vm153, %v157, %v165
  %v167 = vrot.slane %v142, 1
  %v168 = vsel %vm153, %v158, %v167
  %169 = vrot.lane.b32.xlu0 %v154, 127
  %v170 = vpop.permute.xlu0 %169
  %171 = vrot.lane.b32.xlu0 %v155, 127
  %v172 = vpop.permute.xlu0 %171
  %173 = vrot.lane.b32.xlu0 %v156, 127
  %v174 = vpop.permute.xlu0 %173
  %175 = vrot.lane.b32.xlu0 %v157, 127
  %v176 = vpop.permute.xlu0 %175
  %177 = vrot.lane.b32.xlu0 %v158, 127
  %v178 = vpop.permute.xlu0 %177
  %179 = vrot.lane.b32.xlu0 %v160, 127
  %v180 = vpop.permute.xlu0 %179
  %181 = vrot.lane.b32.xlu0 %v162, 127
  %v182 = vpop.permute.xlu0 %181
  %183 = vrot.lane.b32.xlu0 %v164, 127
  %v184 = vpop.permute.xlu0 %183
  %185 = vrot.lane.b32.xlu0 %v166, 127
  %v186 = vpop.permute.xlu0 %185
  %187 = vrot.lane.b32.xlu0 %v168, 127
  %v188 = vpop.permute.xlu0 %187
  %189 = vrot.lane.b32.xlu0 %v159, 127
  %v190 = vpop.permute.xlu0 %189
  %191 = vrot.lane.b32.xlu0 %v161, 127
  %v192 = vpop.permute.xlu0 %191
  %193 = vrot.lane.b32.xlu0 %v163, 127
  %v194 = vpop.permute.xlu0 %193
  %195 = vrot.lane.b32.xlu0 %v165, 127
  %v196 = vpop.permute.xlu0 %195
  %197 = vrot.lane.b32.xlu0 %v167, 127
  %v198 = vpop.permute.xlu0 %197
  %vm199 = vcmask 1039360
  %v200 = vsel %vm199, %v170, %v172
  %v201 = vsel %vm199, %v172, %v174
  %v202 = vsel %vm199, %v174, %v176
  %v203 = vsel %vm199, %v176, %v178
  %v204 = vsel %vm199, %v180, %v182
  %v205 = vsel %vm199, %v182, %v184
  %v206 = vsel %vm199, %v184, %v186
  %v207 = vsel %vm199, %v186, %v188
  %v208 = vsel %vm199, %v190, %v192
  %v209 = vsel %vm199, %v192, %v194
  %v210 = vsel %vm199, %v194, %v196
  %v211 = vsel %vm199, %v196, %v198
  %v224 = vrot.slane %v126, 2
  %v225 = vrot.slane %v127, 2
  %v226 = vrot.slane %v128, 2
  %v227 = vrot.slane %v129, 2
  %v228 = vrot.slane %v130, 2
  %v229 = vrot.slane %v138, 2
  %v230 = vsel %vm125, %v224, %v229
  %v231 = vrot.slane %v139, 2
  %v232 = vsel %vm125, %v225, %v231
  %v233 = vrot.slane %v140, 2
  %v234 = vsel %vm125, %v226, %v233
  %v235 = vrot.slane %v141, 2
  %v236 = vsel %vm125, %v227, %v235
  %v237 = vrot.slane %v142, 2
  %v238 = vsel %vm125, %v228, %v237
  %239 = vrot.lane.b32.xlu0 %v224, 126
  %v240 = vpop.permute.xlu0 %239
  %241 = vrot.lane.b32.xlu0 %v225, 126
  %v242 = vpop.permute.xlu0 %241
  %243 = vrot.lane.b32.xlu0 %v226, 126
  %v244 = vpop.permute.xlu0 %243
  %245 = vrot.lane.b32.xlu0 %v227, 126
  %v246 = vpop.permute.xlu0 %245
  %247 = vrot.lane.b32.xlu0 %v228, 126
  %v248 = vpop.permute.xlu0 %247
  %249 = vrot.lane.b32.xlu0 %v230, 126
  %v250 = vpop.permute.xlu0 %249
  %251 = vrot.lane.b32.xlu0 %v232, 126
  %v252 = vpop.permute.xlu0 %251
  %253 = vrot.lane.b32.xlu0 %v234, 126
  %v254 = vpop.permute.xlu0 %253
  %255 = vrot.lane.b32.xlu0 %v236, 126
  %v256 = vpop.permute.xlu0 %255
  %257 = vrot.lane.b32.xlu0 %v238, 126
  %v258 = vpop.permute.xlu0 %257
  %259 = vrot.lane.b32.xlu0 %v229, 126
  %v260 = vpop.permute.xlu0 %259
  %261 = vrot.lane.b32.xlu0 %v231, 126
  %v262 = vpop.permute.xlu0 %261
  %263 = vrot.lane.b32.xlu0 %v233, 126
  %v264 = vpop.permute.xlu0 %263
  %265 = vrot.lane.b32.xlu0 %v235, 126
  %v266 = vpop.permute.xlu0 %265
  %267 = vrot.lane.b32.xlu0 %v237, 126
  %v268 = vpop.permute.xlu0 %267
  %vm269 = vcmask 1031168
  %v270 = vsel %vm269, %v240, %v242
  %v271 = vsel %vm269, %v242, %v244
  %v272 = vsel %vm269, %v244, %v246
  %v273 = vsel %vm269, %v246, %v248
  %v274 = vsel %vm269, %v250, %v252
  %v275 = vsel %vm269, %v252, %v254
  %v276 = vsel %vm269, %v254, %v256
  %v277 = vsel %vm269, %v256, %v258
  %v278 = vsel %vm269, %v260, %v262
  %v279 = vsel %vm269, %v262, %v264
  %v280 = vsel %vm269, %v264, %v266
  %v281 = vsel %vm269, %v266, %v268
  %vm294 = vcmask 1044480
  %v295 = vrot.slane %v126, 3
  %v296 = vrot.slane %v127, 3
  %v297 = vrot.slane %v128, 3
  %v298 = vrot.slane %v129, 3
  %v299 = vrot.slane %v130, 3
  %v300 = vrot.slane %v138, 3
  %v301 = vsel %vm294, %v295, %v300
  %v302 = vrot.slane %v139, 3
  %v303 = vsel %vm294, %v296, %v302
  %v304 = vrot.slane %v140, 3
  %v305 = vsel %vm294, %v297, %v304
  %v306 = vrot.slane %v141, 3
  %v307 = vsel %vm294, %v298, %v306
  %v308 = vrot.slane %v142, 3
  %v309 = vsel %vm294, %v299, %v308
  %310 = vrot.lane.b32.xlu0 %v295, 125
  %v311 = vpop.permute.xlu0 %310
  %312 = vrot.lane.b32.xlu0 %v296, 125
  %v313 = vpop.permute.xlu0 %312
  %314 = vrot.lane.b32.xlu0 %v297, 125
  %v315 = vpop.permute.xlu0 %314
  %316 = vrot.lane.b32.xlu0 %v298, 125
  %v317 = vpop.permute.xlu0 %316
  %318 = vrot.lane.b32.xlu0 %v299, 125
  %v319 = vpop.permute.xlu0 %318
  %320 = vrot.lane.b32.xlu0 %v301, 125
  %v321 = vpop.permute.xlu0 %320
  %322 = vrot.lane.b32.xlu0 %v303, 125
  %v323 = vpop.permute.xlu0 %322
  %324 = vrot.lane.b32.xlu0 %v305, 125
  %v325 = vpop.permute.xlu0 %324
  %326 = vrot.lane.b32.xlu0 %v307, 125
  %v327 = vpop.permute.xlu0 %326
  %328 = vrot.lane.b32.xlu0 %v309, 125
  %v329 = vpop.permute.xlu0 %328
  %330 = vrot.lane.b32.xlu0 %v300, 125
  %v331 = vpop.permute.xlu0 %330
  %332 = vrot.lane.b32.xlu0 %v302, 125
  %v333 = vpop.permute.xlu0 %332
  %334 = vrot.lane.b32.xlu0 %v304, 125
  %v335 = vpop.permute.xlu0 %334
  %336 = vrot.lane.b32.xlu0 %v306, 125
  %v337 = vpop.permute.xlu0 %336
  %338 = vrot.lane.b32.xlu0 %v308, 125
  %v339 = vpop.permute.xlu0 %338
  %vm340 = vcmask 1022976
  %v341 = vsel %vm340, %v311, %v313
  %v342 = vsel %vm340, %v313, %v315
  %v343 = vsel %vm340, %v315, %v317
  %v344 = vsel %vm340, %v317, %v319
  %v345 = vsel %vm340, %v321, %v323
  %v346 = vsel %vm340, %v323, %v325
  %v347 = vsel %vm340, %v325, %v327
  %v348 = vsel %vm340, %v327, %v329
  %v349 = vsel %vm340, %v331, %v333
  %v350 = vsel %vm340, %v333, %v335
  %v351 = vsel %vm340, %v335, %v337
  %v352 = vsel %vm340, %v337, %v339
  %v365 = vrot.slane %v126, 4
  %v366 = vrot.slane %v127, 4
  %v367 = vrot.slane %v128, 4
  %v368 = vrot.slane %v129, 4
  %v369 = vrot.slane %v130, 4
  %v370 = vrot.slane %v138, 4
  %v371 = vsel %vm137, %v365, %v370
  %v372 = vrot.slane %v139, 4
  %v373 = vsel %vm137, %v366, %v372
  %v374 = vrot.slane %v140, 4
  %v375 = vsel %vm137, %v367, %v374
  %v376 = vrot.slane %v141, 4
  %v377 = vsel %vm137, %v368, %v376
  %v378 = vrot.slane %v142, 4
  %v379 = vsel %vm137, %v369, %v378
  %380 = vrot.lane.b32.xlu0 %v365, 124
  %v381 = vpop.permute.xlu0 %380
  %382 = vrot.lane.b32.xlu0 %v366, 124
  %v383 = vpop.permute.xlu0 %382
  %384 = vrot.lane.b32.xlu0 %v367, 124
  %v385 = vpop.permute.xlu0 %384
  %386 = vrot.lane.b32.xlu0 %v368, 124
  %v387 = vpop.permute.xlu0 %386
  %388 = vrot.lane.b32.xlu0 %v369, 124
  %v389 = vpop.permute.xlu0 %388
  %390 = vrot.lane.b32.xlu0 %v371, 124
  %v391 = vpop.permute.xlu0 %390
  %392 = vrot.lane.b32.xlu0 %v373, 124
  %v393 = vpop.permute.xlu0 %392
  %394 = vrot.lane.b32.xlu0 %v375, 124
  %v395 = vpop.permute.xlu0 %394
  %396 = vrot.lane.b32.xlu0 %v377, 124
  %v397 = vpop.permute.xlu0 %396
  %398 = vrot.lane.b32.xlu0 %v379, 124
  %v399 = vpop.permute.xlu0 %398
  %400 = vrot.lane.b32.xlu0 %v370, 124
  %v401 = vpop.permute.xlu0 %400
  %402 = vrot.lane.b32.xlu0 %v372, 124
  %v403 = vpop.permute.xlu0 %402
  %404 = vrot.lane.b32.xlu0 %v374, 124
  %v405 = vpop.permute.xlu0 %404
  %406 = vrot.lane.b32.xlu0 %v376, 124
  %v407 = vpop.permute.xlu0 %406
  %408 = vrot.lane.b32.xlu0 %v378, 124
  %v409 = vpop.permute.xlu0 %408
  %vm410 = vcmask 1014784
  %v411 = vsel %vm410, %v381, %v383
  %v412 = vsel %vm410, %v383, %v385
  %v413 = vsel %vm410, %v385, %v387
  %v414 = vsel %vm410, %v387, %v389
  %v415 = vsel %vm410, %v391, %v393
  %v416 = vsel %vm410, %v393, %v395
  %v417 = vsel %vm410, %v395, %v397
  %v418 = vsel %vm410, %v397, %v399
  %v419 = vsel %vm410, %v401, %v403
  %v420 = vsel %vm410, %v403, %v405
  %v421 = vsel %vm410, %v405, %v407
  %v422 = vsel %vm410, %v407, %v409
  %v435 = vsel %vm153, %v138, %v200
  %v436 = vsel %vm153, %v139, %v201
  %v437 = vsel %vm153, %v140, %v202
  %v438 = vsel %vm153, %v141, %v203
  %v439 = vsel %vm125, %v208, %v270
  %v440 = vsel %vm125, %v209, %v271
  %v441 = vsel %vm125, %v210, %v272
  %v442 = vsel %vm125, %v211, %v273
  %v443 = vsel %vm294, %v278, %v341
  %v444 = vsel %vm294, %v279, %v342
  %v445 = vsel %vm294, %v280, %v343
  %v446 = vsel %vm294, %v281, %v344
  %v447 = vsel %vm137, %v349, %v411
  %v448 = vsel %vm137, %v350, %v412
  %v449 = vsel %vm137, %v351, %v413
  %v450 = vsel %vm137, %v352, %v414
  %v451 = vsel %vm119, %v419, 1.0
  %v452 = vsel %vm119, %v420, 1.0
  %v453 = vsel %vm119, %v421, 1.0
  %v454 = vsel %vm119, %v422, 1.0
  %v455 = vsel %vm137, %v451, 0.0
  %v456 = vsel %vm137, %v452, 0.0
  %v457 = vsel %vm137, %v453, 0.0
  %v458 = vsel %vm137, %v454, 0.0
  %v459 = vld [vmem:[%s1] sm:$0xff]
  %460 = vmatprep.subr.mxu0 %v127
  %461 = vmatpush1.msra.mxu0 %v126
  %462 = vmatprep.subr.mxu0 %v436
  %463 = vmatpush1.msra.mxu0 %v435
  %464 = vmatprep.subr.mxu0 %v205
  %465 = vmatpush1.msra.mxu0 %v204
  %466 = vmatprep.subr.mxu0 %v440
  %467 = vmatpush1.msra.mxu0 %v439
  %468 = vmatprep.subr.mxu0 %v275
  %469 = vmatpush1.msra.mxu0 %v274
  %470 = vmatprep.subr.mxu0 %v444
  %471 = vmatpush1.msra.mxu0 %v443
  %472 = vmatprep.subr.mxu0 %v346
  %473 = vmatpush1.msra.mxu0 %v345
  %474 = vmatprep.subr.mxu0 %v448
  %475 = vmatpush1.msra.mxu0 %v447
  %476 = vmatprep.subr.mxu0 %v416
  %477 = vmatpush1.msra.mxu0 %v415
  %478 = vmatprep.subr.mxu0 %v456
  %479 = vmatpush1.msra.mxu0 %v455
  %480 = vmatprep.subr.mxu0 0.0
  %481 = vmatpush1.msra.mxu0 0.0
  %482 = vmatprep.subr.mxu0 0.0
  %483 = vmatpush1.msra.mxu0 0.0
  %484 = vmatprep.subr.mxu0 0.0
  %485 = vmatpush1.msra.mxu0 0.0
  %486 = vmatprep.subr.mxu0 0.0
  %487 = vmatpush1.msra.mxu0 0.0
  %488 = vmatprep.subr.mxu0 0.0
  %489 = vmatpush1.msra.mxu0 0.0
  %490 = vmatprep.subr.mxu0 0.0
  %491 = vmatpush1.msra.mxu0 0.0
  %492 = vmatprep.subr.mxu0 0.0
  %493 = vmatpush1.msra.mxu0 0.0
  %494 = vmatprep.subr.mxu0 0.0
  %495 = vmatpush1.msra.mxu0 0.0
  %496 = vmatprep.subr.mxu0 0.0
  %497 = vmatpush1.msra.mxu0 0.0
  %498 = vmatprep.subr.mxu0 0.0
  %499 = vmatpush1.msra.mxu0 0.0
  %500 = vmatprep.subr.mxu0 0.0
  %501 = vmatpush1.msra.mxu0 0.0
  %502 = vmatprep.subr.mxu0 0.0
  %503 = vmatpush1.msra.mxu0 0.0
  %504 = vmatprep.subr.mxu0 0.0
  %505 = vmatpush1.msra.mxu0 0.0
  %506 = vmatprep.subr.mxu0 0.0
  %507 = vmatpush1.msra.mxu0 0.0
  %508 = vmatprep.subr.mxu0 0.0
  %509 = vmatpush1.msra.mxu0 0.0
  %510 = vmatprep.subr.mxu0 0.0
  %511 = vmatpush1.msra.mxu0 0.0
  %512 = vmatprep.subr.mxu0 0.0
  %513 = vmatpush1.msra.mxu0 0.0
  %514 = vmatprep.subr.mxu0 0.0
  %515 = vmatpush1.msra.mxu0 0.0
  %516 = vmatprep.subr.mxu0 0.0
  %517 = vmatpush1.msra.mxu0 0.0
  %518 = vmatprep.subr.mxu0 0.0
  %519 = vmatpush1.msra.mxu0 0.0
  %520 = vmatprep.subr.mxu0 0.0
  %521 = vmatpush1.msra.mxu0 0.0
  %522 = vmatprep.subr.mxu0 0.0
  %523 = vmatpush1.msra.mxu0 0.0
  %524 = vmatprep.mubr.f32.mxu0 0.0
  %525 = vmatmul.mubr.f32.gmra.mrb[0].mxu0 %v459
  %v526 = vpop.f32.mrb[0].mxu0
  %v527 = vadd.f32 0.0, %v526
  %v528 = vpop.f32.mrb[0].mxu0
  %v529 = vadd.f32 0.0, %v528
  %530 = vdwg.mxu0
  %531 = vmatprep.subr.mxu0 %v129
  %532 = vmatpush1.msra.mxu0 %v128
  %533 = vmatprep.subr.mxu0 %v438
  %534 = vmatpush1.msra.mxu0 %v437
  %535 = vmatprep.subr.mxu0 %v207
  %536 = vmatpush1.msra.mxu0 %v206
  %537 = vmatprep.subr.mxu0 %v442
  %538 = vmatpush1.msra.mxu0 %v441
  %539 = vmatprep.subr.mxu0 %v277
  %540 = vmatpush1.msra.mxu0 %v276
  %541 = vmatprep.subr.mxu0 %v446
  %542 = vmatpush1.msra.mxu0 %v445
  %543 = vmatprep.subr.mxu0 %v348
  %544 = vmatpush1.msra.mxu0 %v347
  %545 = vmatprep.subr.mxu0 %v450
  %546 = vmatpush1.msra.mxu0 %v449
  %547 = vmatprep.subr.mxu0 %v418
  %548 = vmatpush1.msra.mxu0 %v417
  %549 = vmatprep.subr.mxu0 %v458
  %550 = vmatpush1.msra.mxu0 %v457
  %551 = vmatprep.subr.mxu0 0.0
  %552 = vmatpush1.msra.mxu0 0.0
  %553 = vmatprep.subr.mxu0 0.0
  %554 = vmatpush1.msra.mxu0 0.0
  %555 = vmatprep.subr.mxu0 0.0
  %556 = vmatpush1.msra.mxu0 0.0
  %557 = vmatprep.subr.mxu0 0.0
  %558 = vmatpush1.msra.mxu0 0.0
  %559 = vmatprep.subr.mxu0 0.0
  %560 = vmatpush1.msra.mxu0 0.0
  %561 = vmatprep.subr.mxu0 0.0
  %562 = vmatpush1.msra.mxu0 0.0
  %563 = vmatprep.subr.mxu0 0.0
  %564 = vmatpush1.msra.mxu0 0.0
  %565 = vmatprep.subr.mxu0 0.0
  %566 = vmatpush1.msra.mxu0 0.0
  %567 = vmatprep.subr.mxu0 0.0
  %568 = vmatpush1.msra.mxu0 0.0
  %569 = vmatprep.subr.mxu0 0.0
  %570 = vmatpush1.msra.mxu0 0.0
  %571 = vmatprep.subr.mxu0 0.0
  %572 = vmatpush1.msra.mxu0 0.0
  %573 = vmatprep.subr.mxu0 0.0
  %574 = vmatpush1.msra.mxu0 0.0
  %575 = vmatprep.subr.mxu0 0.0
  %576 = vmatpush1.msra.mxu0 0.0
  %577 = vmatprep.subr.mxu0 0.0
  %578 = vmatpush1.msra.mxu0 0.0
  %579 = vmatprep.subr.mxu0 0.0
  %580 = vmatpush1.msra.mxu0 0.0
  %581 = vmatprep.subr.mxu0 0.0
  %582 = vmatpush1.msra.mxu0 0.0
  %583 = vmatprep.subr.mxu0 0.0
  %584 = vmatpush1.msra.mxu0 0.0
  %585 = vmatprep.subr.mxu0 0.0
  %586 = vmatpush1.msra.mxu0 0.0
  %587 = vmatprep.subr.mxu0 0.0
  %588 = vmatpush1.msra.mxu0 0.0
  %589 = vmatprep.subr.mxu0 0.0
  %590 = vmatpush1.msra.mxu0 0.0
  %591 = vmatprep.subr.mxu0 0.0
  %592 = vmatpush1.msra.mxu0 0.0
  %593 = vmatprep.subr.mxu0 0.0
  %594 = vmatpush1.msra.mxu0 0.0
  %595 = vmatprep.mubr.f32.mxu0 0.0
  %596 = vmatmul.mubr.f32.gmra.mrb[0].mxu0 %v459
  %v597 = vpop.f32.mrb[0].mxu0
  %v598 = vadd.f32 0.0, %v597
  %v599 = vpop.f32.mrb[0].mxu0
  %v600 = vadd.f32 0.0, %v599
  %601 = vdwg.mxu0
  %602 = vst [vmem:[%s2] sm:$0xff] %v527
  %603 = vst [vmem:[%s2 + $0x8] sm:$0xff] %v529
  %604 = vst [vmem:[%s2 + $0x10] sm:$0xff] %v598
  %605 = vst [vmem:[%s2 + $0x18] sm:$0xff] %v600
  // Predicated region
  $region10: #{conv2d_pallas.1} parent=0 // pred_check
    _
  $region11: #{conv2d_pallas.1} parent=0 // pred_check_branch
    %607 = sbr.rel (0) target = $region13
  $region12: #{conv2d_pallas.1} parent=0 // pred_region
    _
  $region13: #{conv2d_pallas.1} parent=0 // pred_fallthru
    _
  // Predicated region
  $region14: #{conv2d_pallas.1} parent=0 // pred_check
    _
  $region15: #{conv2d_pallas.1} parent=0 // pred_check_branch
    %609 = sbr.rel (0) target = $region17
  $region16: #{conv2d_pallas.1} parent=0 // pred_region
    _
  $region17: #{conv2d_pallas.1} parent=0 // pred_fallthru
    _

</llo_original>
